<compile_context>
chip_gen: v7x
topology: tpu7x:2x2x1
jax: 0.10.0
libtpu: 0.0.40
codegen_flags: <defaults>
</compile_context>

<pallas_src>
import functools

import jax
import jax.numpy as jnp
from jax import lax
from jax.experimental import pallas as pl
from jax.experimental.pallas import tpu as pltpu

KH = KW = 4
STRIDE = 2
PAD = 1
EPS = 1e-5
NEG_SLOPE = 0.2

_LANE = 128            # TPU lane width
_SUBLANE_PAD = 16      # sublane multiple safe for both bf16 (16) and f32 (8) operands
_MAX_HW_TILE = 2048
# Conservative working-set budget so double-buffering survives v7x's 64 MiB/TC VMEM
# (v5e/v6e have 128 MiB and are never the binding constraint).
_VMEM_BUDGET = 28 * 1024 * 1024
_VMEM_LIMIT = 48 * 1024 * 1024


def _round_up(x, m):
    return (x + m - 1) // m * m


def _choose_hw_tile(hw, k_p, c_out_p):
    """Spatial tile (multiple of 128) sized so pass-1 buffers fit the VMEM budget."""
    per_row = 2 * (k_p * 2 + c_out_p * 4)       # dbl-buffered: bf16 patches in + f32 y out
    fixed = 2 * (c_out_p * k_p * 2) + 4096      # weight (dbl-buffered) + stats slack
    avail = max(_VMEM_BUDGET - fixed, per_row * _LANE)
    tile = max(_LANE, (avail // per_row) // _LANE * _LANE)
    return min(tile, _MAX_HW_TILE, _round_up(hw, _LANE))


def _conv_stats_kernel(p_ref, w_ref, y_ref, ssum_ref, ssq_ref):
    # p_ref   : (K_p, TILE)     bf16  one spatial tile of one batch element's patches
    # w_ref   : (C_out_p, K_p)  bf16  flattened conv weight
    # y_ref   : (C_out_p, TILE) f32   un-normalized conv output tile (lane-dense stores)
    # ssum/ssq: (C_out_p, 1)    f32   per-channel accumulators, VMEM-resident across
    #                                 the hw-tile ("arbitrary") grid axis.
    t = pl.program_id(1)

    # Conv as a bf16 MXU matmul with f32 accumulation.
    y = jnp.dot(w_ref[...], p_ref[...], preferred_element_type=jnp.float32)
    y_ref[...] = y

    @pl.when(t == 0)
    def _init():
        ssum_ref[...] = jnp.zeros_like(ssum_ref)
        ssq_ref[...] = jnp.zeros_like(ssq_ref)

    # Single-pass stats (sum, sum-of-squares). Zero-padded spatial columns and
    # zero-padded output channels contribute exactly 0 to both sums.
    ssum_ref[...] += jnp.sum(y, axis=1, keepdims=True)
    ssq_ref[...] += jnp.sum(y * y, axis=1, keepdims=True)


def _norm_lrelu_kernel(y_ref, ssum_ref, ssq_ref, o_ref, *, inv_hw):
    # InstanceNorm2d (biased variance, eps=1e-5, no affine) + LeakyReLU(0.2).
    y = y_ref[...]                                          # (C_out_p, TILE)
    mean = ssum_ref[...] * inv_hw                           # (C_out_p, 1)
    var = jnp.maximum(ssq_ref[...] * inv_hw - mean * mean, 0.0)
    rstd = lax.rsqrt(var + EPS)                             # EUP slot (cheap)
    yn = (y - mean) * rstd
    o_ref[...] = jnp.where(yn > 0.0, yn, NEG_SLOPE * yn).astype(o_ref.dtype)


def _im2col_nchw(x, h_out, w_out):
    """x: (N, C, H, W) -> patches (N, C*KH*KW, H_out*W_out), K ordered (C, kh, kw).

    Spatial axis stays last (lane dim) -- no final transpose needed.
    """
    n, c, _, _ = x.shape
    xp = jnp.pad(x, ((0, 0), (0, 0), (PAD, PAD), (PAD, PAD)))
    cols = []
    for kh in range(KH):
        for kw in range(KW):
            cols.append(xp[:, :, kh: kh + STRIDE * h_out: STRIDE,
                                 kw: kw + STRIDE * w_out: STRIDE])
    # (KH*KW, N, C, Ho, Wo) -> (N, C, KH*KW, Ho, Wo) -> (N, C*KH*KW, Ho*Wo)
    patches = jnp.stack(cols, axis=0).transpose(1, 2, 0, 3, 4)
    return patches.reshape(n, c * KH * KW, h_out * w_out)


def unet_downsample(x, weight):
    """x: (N, C_in, H, W) f32 NCHW; weight: (C_out, C_in, 4, 4) (PyTorch OIHW)."""
    n, c_in, h, w = x.shape
    c_out = weight.shape[0]
    h_out = (h + 2 * PAD - KH) // STRIDE + 1
    w_out = (w + 2 * PAD - KW) // STRIDE + 1
    hw = h_out * w_out
    k = c_in * KH * KW

    # Pad the contraction dim to a lane multiple (full-width MXU pushes) and C_out to a
    # sublane multiple. Zero padding is exact: padded K rows/cols contribute 0, padded
    # output channels are all-zero and sliced off at the end.
    k_p = _round_up(k, _LANE)
    c_out_p = _round_up(c_out, _SUBLANE_PAD)
    tile = _choose_hw_tile(hw, k_p, c_out_p)
    hw_p = _round_up(hw, tile)
    num_tiles = hw_p // tile

    # TODO(synk): build the im2col block in-kernel (DMA the padded input rows needed per
    # spatial tile) to avoid materializing this ~4x-duplicated patch tensor in HBM.
    patches = _im2col_nchw(x, h_out, w_out)                        # (N, K, HW)
    patches = jnp.pad(patches, ((0, 0), (0, k_p - k), (0, hw_p - hw)))
    patches = patches.astype(jnp.bfloat16)                         # bf16-native MXU feed

    w_flat = weight.reshape(c_out, k)
    w_flat = jnp.pad(w_flat, ((0, c_out_p - c_out), (0, k_p - k)))
    w_flat = w_flat.astype(jnp.bfloat16)

    # ---- pass 1: conv matmul + per-channel sum / sum-of-squares ----
    y, ssum, ssq = pl.pallas_call(
        _conv_stats_kernel,
        out_shape=(
            jax.ShapeDtypeStruct((n, c_out_p, hw_p), jnp.float32),
            jax.ShapeDtypeStruct((n, c_out_p, 1), jnp.float32),
            jax.ShapeDtypeStruct((n, c_out_p, 1), jnp.float32),
        ),
        grid_spec=pltpu.PrefetchScalarGridSpec(
            num_scalar_prefetch=0,
            grid=(n, num_tiles),
            in_specs=[
                pl.BlockSpec((None, k_p, tile), lambda b, t: (b, 0, t)),
                pl.BlockSpec((c_out_p, k_p), lambda b, t: (0, 0)),
            ],
            out_specs=[
                pl.BlockSpec((None, c_out_p, tile), lambda b, t: (b, 0, t)),
                pl.BlockSpec((None, c_out_p, 1), lambda b, t: (b, 0, 0)),
                pl.BlockSpec((None, c_out_p, 1), lambda b, t: (b, 0, 0)),
            ],
        ),
        compiler_params=pltpu.CompilerParams(
            dimension_semantics=("parallel", "arbitrary"),
            vmem_limit_bytes=_VMEM_LIMIT),
    )(patches, w_flat)

    # ---- pass 2: InstanceNorm + LeakyReLU (both axes parallel -> both v7x TCs) ----
    out = pl.pallas_call(
        functools.partial(_norm_lrelu_kernel, inv_hw=1.0 / hw),
        out_shape=jax.ShapeDtypeStruct((n, c_out_p, hw_p), x.dtype),
        grid_spec=pltpu.PrefetchScalarGridSpec(
            num_scalar_prefetch=0,
            grid=(n, num_tiles),
            in_specs=[
                pl.BlockSpec((None, c_out_p, tile), lambda b, t: (b, 0, t)),
                pl.BlockSpec((None, c_out_p, 1), lambda b, t: (b, 0, 0)),
                pl.BlockSpec((None, c_out_p, 1), lambda b, t: (b, 0, 0)),
            ],
            out_specs=pl.BlockSpec((None, c_out_p, tile), lambda b, t: (b, 0, t)),
        ),
        compiler_params=pltpu.CompilerParams(
            dimension_semantics=("parallel", "parallel"),
            vmem_limit_bytes=_VMEM_LIMIT),
    )(y, ssum, ssq)

    # (N, C_out_p, HW_p) -> crop padding -> NCHW. No transpose: lane dim is spatial.
    return out[:, :c_out, :hw].reshape(n, c_out, h_out, w_out)


def _reference(x, weight):
    """Pure-JAX reference. Conv uses bf16 inputs / f32 accumulation to mirror the
    kernel's (review-mandated) bf16 MXU feed; norm/activation stay in f32."""
    y = lax.conv_general_dilated(
        x.astype(jnp.bfloat16), weight.astype(jnp.bfloat16),
        window_strides=(STRIDE, STRIDE),
        padding=((PAD, PAD), (PAD, PAD)),
        dimension_numbers=("NCHW", "OIHW", "NCHW"),
        preferred_element_type=jnp.float32)
    mean = jnp.mean(y, axis=(2, 3), keepdims=True)
    var = jnp.mean((y - mean) ** 2, axis=(2, 3), keepdims=True)
    y = (y - mean) * lax.rsqrt(var + EPS)
    return jnp.where(y > 0, y, NEG_SLOPE * y)


if __name__ == "__main__":
    key = jax.random.PRNGKey(0)
    kx, kw_ = jax.random.split(key)

    N, C_IN, H, W = 2, 4, 16, 16
    C_OUT = 8

    x = jax.random.normal(kx, (N, C_IN, H, W), dtype=jnp.float32)
    # Deterministic synthetic conv weight, PyTorch layout (C_out, C_in, 4, 4).
    weight = 0.1 * jax.random.normal(kw_, (C_OUT, C_IN, KH, KW), dtype=jnp.float32)

    out = jax.jit(unet_downsample)(x, weight)
    out = jax.block_until_ready(out)

    ref = _reference(x, weight)
    assert out.shape == (N, C_OUT, H // 2, W // 2), out.shape
    # Tolerance accounts for accumulation-order differences between the MXU matmul and
    # XLA's conv (both consume identical bf16 inputs, accumulate in f32).
    assert jnp.allclose(out, ref, atol=2e-3, rtol=2e-3), \
        float(jnp.max(jnp.abs(out - ref)))

    print("KERNEL_OK")
</pallas_src>

<mosaic_0001>
module attributes {stable_mosaic.version = 11 : i64} {
  func.func @_conv_stats_kernel(%arg0: i32, %arg1: i32, %arg2: memref<1x128x128xbf16, #tpu.memory_space<vmem>>, %arg3: memref<16x128xbf16, #tpu.memory_space<vmem>>, %arg4: memref<1x16x128xf32, #tpu.memory_space<vmem>>, %arg5: memref<1x16x1xf32, #tpu.memory_space<vmem>>, %arg6: memref<1x16x1xf32, #tpu.memory_space<vmem>>) attributes {dimension_semantics = [#tpu.dimension_semantics<parallel>, #tpu.dimension_semantics<arbitrary>], iteration_bounds = array<i64: 2, 1>, scalar_prefetch = 0 : i64, scratch_operands = 0 : i64, tpu.core_type = #tpu.core_type<tc>, window_params = [{transform_indices = @transform_0, window_bounds = array<i64: 1, 128, 128>}, {pipeline_mode = #tpu.pipeline_mode<synchronous>, transform_indices = @transform_1, window_bounds = array<i64: 16, 128>}, {transform_indices = @transform_2, window_bounds = array<i64: 1, 16, 128>}, {transform_indices = @transform_3, window_bounds = array<i64: 1, 16, 1>}, {transform_indices = @transform_4, window_bounds = array<i64: 1, 16, 1>}]} {
    %c0 = arith.constant 0 : index
    %c0_0 = arith.constant 0 : index
    %0 = vector.load %arg3[%c0, %c0_0] : memref<16x128xbf16, #tpu.memory_space<vmem>>, vector<16x128xbf16>
    %c0_1 = arith.constant 0 : index
    %c0_2 = arith.constant 0 : index
    %c0_3 = arith.constant 0 : index
    %1 = vector.load %arg2[%c0_1, %c0_2, %c0_3] : memref<1x128x128xbf16, #tpu.memory_space<vmem>>, vector<1x128x128xbf16>
    %2 = vector.shape_cast %1 : vector<1x128x128xbf16> to vector<128x128xbf16>
    %cst = arith.constant dense<0.000000e+00> : vector<16x128xf32>
    %3 = tpu.matmul %0, %2, %cst {dimension_numbers = #tpu.dot_dimension_numbers<[1], [0], [0], [1], [0, 0, 1, 1], [], []>} : vector<16x128xbf16>, vector<128x128xbf16>, vector<16x128xf32> -> vector<16x128xf32>
    %c0_4 = arith.constant 0 : index
    %c0_5 = arith.constant 0 : index
    %c0_6 = arith.constant 0 : index
    %4 = vector.load %arg4[%c0_4, %c0_5, %c0_6] : memref<1x16x128xf32, #tpu.memory_space<vmem>>, vector<1x16x128xf32>
    %5 = vector.shape_cast %4 : vector<1x16x128xf32> to vector<16x128xf32>
    %6 = vector.shape_cast %3 : vector<16x128xf32> to vector<1x16x128xf32>
    tpu.vector_store %arg4[%c0_4, %c0_5, %c0_6], %6 {strides = array<i32>} : memref<1x16x128xf32, #tpu.memory_space<vmem>>, vector<1x16x128xf32>,
    %c0_i32 = arith.constant 0 : i32
    %7 = arith.cmpi eq, %arg1, %c0_i32 : i32
    %8 = arith.extui %7 : i1 to i32
    %c0_i32_7 = arith.constant 0 : i32
    %9 = arith.cmpi ne, %8, %c0_i32_7 : i32
    scf.if %9 {
      %cst_22 = arith.constant 0.000000e+00 : f32
      %27 = vector.broadcast %cst_22 : f32 to vector<16x1xf32>
      %c0_23 = arith.constant 0 : index
      %c0_24 = arith.constant 0 : index
      %c0_25 = arith.constant 0 : index
      %28 = vector.load %arg5[%c0_23, %c0_24, %c0_25] : memref<1x16x1xf32, #tpu.memory_space<vmem>>, vector<1x16x1xf32>
      %29 = vector.shape_cast %28 : vector<1x16x1xf32> to vector<16x1xf32>
      %30 = vector.shape_cast %27 : vector<16x1xf32> to vector<1x16x1xf32>
      tpu.vector_store %arg5[%c0_23, %c0_24, %c0_25], %30 {strides = array<i32>} : memref<1x16x1xf32, #tpu.memory_space<vmem>>, vector<1x16x1xf32>,
      %cst_26 = arith.constant 0.000000e+00 : f32
      %31 = vector.broadcast %cst_26 : f32 to vector<16x1xf32>
      %c0_27 = arith.constant 0 : index
      %c0_28 = arith.constant 0 : index
      %c0_29 = arith.constant 0 : index
      %32 = vector.load %arg6[%c0_27, %c0_28, %c0_29] : memref<1x16x1xf32, #tpu.memory_space<vmem>>, vector<1x16x1xf32>
      %33 = vector.shape_cast %32 : vector<1x16x1xf32> to vector<16x1xf32>
      %34 = vector.shape_cast %31 : vector<16x1xf32> to vector<1x16x1xf32>
      tpu.vector_store %arg6[%c0_27, %c0_28, %c0_29], %34 {strides = array<i32>} : memref<1x16x1xf32, #tpu.memory_space<vmem>>, vector<1x16x1xf32>,
    } else {
    }
    %c0_8 = arith.constant 0 : index
    %c0_9 = arith.constant 0 : index
    %c0_10 = arith.constant 0 : index
    %10 = vector.load %arg5[%c0_8, %c0_9, %c0_10] : memref<1x16x1xf32, #tpu.memory_space<vmem>>, vector<1x16x1xf32>
    %11 = vector.shape_cast %10 : vector<1x16x1xf32> to vector<16x1xf32>
    %cst_11 = arith.constant dense<0.000000e+00> : vector<16xf32>
    %12 = vector.multi_reduction <add>, %3, %cst_11 [1] : vector<16x128xf32> to vector<16xf32>
    %13 = vector.shape_cast %12 : vector<16xf32> to vector<16x1xf32>
    %14 = arith.addf %11, %13 : vector<16x1xf32>
    %c0_12 = arith.constant 0 : index
    %c0_13 = arith.constant 0 : index
    %c0_14 = arith.constant 0 : index
    %15 = vector.load %arg5[%c0_12, %c0_13, %c0_14] : memref<1x16x1xf32, #tpu.memory_space<vmem>>, vector<1x16x1xf32>
    %16 = vector.shape_cast %15 : vector<1x16x1xf32> to vector<16x1xf32>
    %17 = vector.shape_cast %14 : vector<16x1xf32> to vector<1x16x1xf32>
    tpu.vector_store %arg5[%c0_12, %c0_13, %c0_14], %17 {strides = array<i32>} : memref<1x16x1xf32, #tpu.memory_space<vmem>>, vector<1x16x1xf32>,
    %c0_15 = arith.constant 0 : index
    %c0_16 = arith.constant 0 : index
    %c0_17 = arith.constant 0 : index
    %18 = vector.load %arg6[%c0_15, %c0_16, %c0_17] : memref<1x16x1xf32, #tpu.memory_space<vmem>>, vector<1x16x1xf32>
    %19 = vector.shape_cast %18 : vector<1x16x1xf32> to vector<16x1xf32>
    %20 = arith.mulf %3, %3 : vector<16x128xf32>
    %cst_18 = arith.constant dense<0.000000e+00> : vector<16xf32>
    %21 = vector.multi_reduction <add>, %20, %cst_18 [1] : vector<16x128xf32> to vector<16xf32>
    %22 = vector.shape_cast %21 : vector<16xf32> to vector<16x1xf32>
    %23 = arith.addf %19, %22 : vector<16x1xf32>
    %c0_19 = arith.constant 0 : index
    %c0_20 = arith.constant 0 : index
    %c0_21 = arith.constant 0 : index
    %24 = vector.load %arg6[%c0_19, %c0_20, %c0_21] : memref<1x16x1xf32, #tpu.memory_space<vmem>>, vector<1x16x1xf32>
    %25 = vector.shape_cast %24 : vector<1x16x1xf32> to vector<16x1xf32>
    %26 = vector.shape_cast %23 : vector<16x1xf32> to vector<1x16x1xf32>
    tpu.vector_store %arg6[%c0_19, %c0_20, %c0_21], %26 {strides = array<i32>} : memref<1x16x1xf32, #tpu.memory_space<vmem>>, vector<1x16x1xf32>,
    return
  }
  func.func @transform_0(%arg0: i32, %arg1: i32) -> (i32, i32, i32) {
    %c0_i32 = arith.constant 0 : i32
    %c0_i32_0 = arith.constant 0 : i32
    return %arg0, %c0_i32, %arg1 : i32, i32, i32
  }
  func.func @transform_1(%arg0: i32, %arg1: i32) -> (i32, i32) {
    %c0_i32 = arith.constant 0 : i32
    %c0_i32_0 = arith.constant 0 : i32
    %c0_i32_1 = arith.constant 0 : i32
    return %c0_i32, %c0_i32_0 : i32, i32
  }
  func.func @transform_2(%arg0: i32, %arg1: i32) -> (i32, i32, i32) {
    %c0_i32 = arith.constant 0 : i32
    %c0_i32_0 = arith.constant 0 : i32
    return %arg0, %c0_i32, %arg1 : i32, i32, i32
  }
  func.func @transform_3(%arg0: i32, %arg1: i32) -> (i32, i32, i32) {
    %c0_i32 = arith.constant 0 : i32
    %c0_i32_0 = arith.constant 0 : i32
    %c0_i32_1 = arith.constant 0 : i32
    return %arg0, %c0_i32, %c0_i32_0 : i32, i32, i32
  }
  func.func @transform_4(%arg0: i32, %arg1: i32) -> (i32, i32, i32) {
    %c0_i32 = arith.constant 0 : i32
    %c0_i32_0 = arith.constant 0 : i32
    %c0_i32_1 = arith.constant 0 : i32
    return %arg0, %c0_i32, %c0_i32_0 : i32, i32, i32
  }
}

module attributes {stable_mosaic.version = 11 : i64} {
  func.func @_norm_lrelu_kernel(%arg0: i32, %arg1: i32, %arg2: memref<1x16x128xf32, #tpu.memory_space<vmem>>, %arg3: memref<1x16x1xf32, #tpu.memory_space<vmem>>, %arg4: memref<1x16x1xf32, #tpu.memory_space<vmem>>, %arg5: memref<1x16x128xf32, #tpu.memory_space<vmem>>) attributes {dimension_semantics = [#tpu.dimension_semantics<parallel>, #tpu.dimension_semantics<parallel>], iteration_bounds = array<i64: 2, 1>, scalar_prefetch = 0 : i64, scratch_operands = 0 : i64, tpu.core_type = #tpu.core_type<tc>, window_params = [{transform_indices = @transform_0, window_bounds = array<i64: 1, 16, 128>}, {transform_indices = @transform_1, window_bounds = array<i64: 1, 16, 1>}, {transform_indices = @transform_2, window_bounds = array<i64: 1, 16, 1>}, {transform_indices = @transform_3, window_bounds = array<i64: 1, 16, 128>}]} {
    %c0 = arith.constant 0 : index
    %c0_0 = arith.constant 0 : index
    %c0_1 = arith.constant 0 : index
    %0 = vector.load %arg2[%c0, %c0_0, %c0_1] : memref<1x16x128xf32, #tpu.memory_space<vmem>>, vector<1x16x128xf32>
    %1 = vector.shape_cast %0 : vector<1x16x128xf32> to vector<16x128xf32>
    %c0_2 = arith.constant 0 : index
    %c0_3 = arith.constant 0 : index
    %c0_4 = arith.constant 0 : index
    %2 = vector.load %arg3[%c0_2, %c0_3, %c0_4] : memref<1x16x1xf32, #tpu.memory_space<vmem>>, vector<1x16x1xf32>
    %3 = vector.shape_cast %2 : vector<1x16x1xf32> to vector<16x1xf32>
    %cst = arith.constant 1.562500e-02 : f32
    %4 = vector.broadcast %cst : f32 to vector<16x1xf32>
    %5 = arith.mulf %3, %4 : vector<16x1xf32>
    %c0_5 = arith.constant 0 : index
    %c0_6 = arith.constant 0 : index
    %c0_7 = arith.constant 0 : index
    %6 = vector.load %arg4[%c0_5, %c0_6, %c0_7] : memref<1x16x1xf32, #tpu.memory_space<vmem>>, vector<1x16x1xf32>
    %7 = vector.shape_cast %6 : vector<1x16x1xf32> to vector<16x1xf32>
    %cst_8 = arith.constant 1.562500e-02 : f32
    %8 = vector.broadcast %cst_8 : f32 to vector<16x1xf32>
    %9 = arith.mulf %7, %8 : vector<16x1xf32>
    %10 = arith.mulf %5, %5 : vector<16x1xf32>
    %11 = arith.subf %9, %10 : vector<16x1xf32>
    %cst_9 = arith.constant 0.000000e+00 : f32
    %12 = vector.broadcast %cst_9 : f32 to vector<16x1xf32>
    %13 = arith.maximumf %11, %12 : vector<16x1xf32>
    %cst_10 = arith.constant 9.99999974E-6 : f32
    %14 = vector.broadcast %cst_10 : f32 to vector<16x1xf32>
    %15 = arith.addf %13, %14 : vector<16x1xf32>
    %16 = math.rsqrt %15 : vector<16x1xf32>
    %17 = vector.broadcast %5 : vector<16x1xf32> to vector<16x128xf32>
    %18 = arith.subf %1, %17 : vector<16x128xf32>
    %19 = vector.broadcast %16 : vector<16x1xf32> to vector<16x128xf32>
    %20 = arith.mulf %18, %19 : vector<16x128xf32>
    %cst_11 = arith.constant 0.000000e+00 : f32
    %21 = vector.broadcast %cst_11 : f32 to vector<16x128xf32>
    %22 = arith.cmpf ogt, %20, %21 : vector<16x128xf32>
    %cst_12 = arith.constant 2.000000e-01 : f32
    %23 = vector.broadcast %cst_12 : f32 to vector<16x128xf32>
    %24 = arith.mulf %23, %20 : vector<16x128xf32>
    %25 = arith.select %22, %20, %24 : vector<16x128xi1>, vector<16x128xf32>
    %c0_13 = arith.constant 0 : index
    %c0_14 = arith.constant 0 : index
    %c0_15 = arith.constant 0 : index
    %26 = vector.load %arg5[%c0_13, %c0_14, %c0_15] : memref<1x16x128xf32, #tpu.memory_space<vmem>>, vector<1x16x128xf32>
    %27 = vector.shape_cast %26 : vector<1x16x128xf32> to vector<16x128xf32>
    %28 = vector.shape_cast %25 : vector<16x128xf32> to vector<1x16x128xf32>
    tpu.vector_store %arg5[%c0_13, %c0_14, %c0_15], %28 {strides = array<i32>} : memref<1x16x128xf32, #tpu.memory_space<vmem>>, vector<1x16x128xf32>,
    return
  }
  func.func @transform_0(%arg0: i32, %arg1: i32) -> (i32, i32, i32) {
    %c0_i32 = arith.constant 0 : i32
    %c0_i32_0 = arith.constant 0 : i32
    return %arg0, %c0_i32, %arg1 : i32, i32, i32
  }
  func.func @transform_1(%arg0: i32, %arg1: i32) -> (i32, i32, i32) {
    %c0_i32 = arith.constant 0 : i32
    %c0_i32_0 = arith.constant 0 : i32
    %c0_i32_1 = arith.constant 0 : i32
    return %arg0, %c0_i32, %c0_i32_0 : i32, i32, i32
  }
  func.func @transform_2(%arg0: i32, %arg1: i32) -> (i32, i32, i32) {
    %c0_i32 = arith.constant 0 : i32
    %c0_i32_0 = arith.constant 0 : i32
    %c0_i32_1 = arith.constant 0 : i32
    return %arg0, %c0_i32, %c0_i32_0 : i32, i32, i32
  }
  func.func @transform_3(%arg0: i32, %arg1: i32) -> (i32, i32, i32) {
    %c0_i32 = arith.constant 0 : i32
    %c0_i32_0 = arith.constant 0 : i32
    return %arg0, %c0_i32, %arg1 : i32, i32, i32
  }
}

</mosaic_0001>

<llo_original>
// kernel: unet_downsample.3
$region0: #{unet_downsample.3}
  #allocation0 [shape = 'u32[]', space=smem, size = 0x4, offset = 0x4, fixed_abs, tag = 'smem constant byte address 0x4 - core index']
  #allocation1 [shape = 'u32[144,128]{1,0:T(1,128)}', space=vmem, size = 0x12000, scoped, tag = 'internal scratch']
  %s0 = inlined_call_operand.vmem [shape: f32[2,16,128], index: 0, kind: input, shape index: {}]
  %s1 = inlined_call_operand.vmem [shape: f32[2,16,1], index: 1, kind: input, shape index: {}]
  %s2 = inlined_call_operand.vmem [shape: f32[2,16,1], index: 2, kind: input, shape index: {}]
  %s3 = inlined_call_operand.vmem [shape: f32[2,16,128], index: 3, kind: output, shape index: {}]
  %s4 = sld [smem:[#allocation0]]
  $region45: #{unet_downsample.3} parent=0
    _
  %s6 = ssub.s32 1, %s4
  %s7 = scalar_select 0, %s6, %s4
  loop: start=0, step=1, limit=4
  $region2: #{unet_downsample.3} parent=0 // loop_pre_header
    _
  $region3: #{unet_downsample.3} parent=0 // loop_header
    %s9 = sphi 0, %s13
    %p10 = scmp.ge.s32.totalorder %s9, 4
    %s16 = sphi 0, %s28
    %s17 = sphi 0, %s24
    %s18 = sphi 0, %s16
    %s19 = sphi 0, %s17
    %s20 = sphi 0, %s18
    %s21 = sphi 0, %s19
    %s33 = sphi 0, %s35
    %s36 = sphi 0, %s33
    %s37 = sphi 0, %s36
    %s53 = sphi 0, %s37
    %s59 = sphi 0, %s61
    %s62 = sphi 0, %s59
    %s63 = sphi 0, %s62
    %s79 = sphi 0, %s63
    %s85 = sphi 0, %s87
    %s88 = sphi 0, %s85
    %s89 = sphi 0, %s88
    %s105 = sphi 0, %s89
    %s113 = sphi 0, %s115
    %s116 = sphi 0, %s113
    %s117 = sphi 0, %s116
    %s133 = sphi 0, %s117
  $region4: #{unet_downsample.3} parent=0 // loop_header_branch
    %12 = sbr.rel (%p10) target = $region8
  $region5: #{unet_downsample.3} parent=0 // loop_body
    %s14 = ssub.s32 %s9, 1
    %s15 = ssub.s32 %s9, 2
    %s22 = sadd.s32 1, %s17
    %p23 = scmp.ge.s32.totalorder %s22, 1
    %s24 = scalar_select %p23, 0, %s22
    %s25 = sadd.s32 1, %s16
    %s26 = scalar_select %p23, %s25, %s16
    %p27 = scmp.ge.s32.totalorder %s26, 2
    %s28 = scalar_select %p27, 0, %s26
    %s29 = ssub.s32 %s16, %s28
    %s30 = ssub.s32 %s17, %s24
    %s31 = sor.u32 %s29, %s30
    %p32 = scmp.eq.s32.totalorder %s31, 0
    %s34 = sadd.s32 %s33, 1
    %s35 = scalar_select %p32, %s33, %s34
    %p38 = pneg %p32
    %p39 = scmp.eq.s32.totalorder %s9, 1
    %p40 = por %p38, %p39
    %p41 = scmp.ne.s32.totalorder %s33, %s36
    %p42 = scmp.eq.s32.totalorder %s9, 0
    %p43 = por %p41, %p42
    %p44 = scmp.ne.s32.totalorder %s33, %s36
    %p45 = scmp.eq.s32.totalorder %s14, 1
    %p46 = por %p44, %p45
    %p47 = scmp.ne.s32.totalorder %s36, %s37
    %p48 = scmp.eq.s32.totalorder %s14, 0
    %p49 = por %p47, %p48
    %p50 = scmp.ne.s32.totalorder %s36, %s37
    %p51 = scmp.eq.s32.totalorder %s15, 1
    %p52 = por %p50, %p51
    %p54 = scmp.ne.s32.totalorder %s37, %s53
    %p55 = scmp.eq.s32.totalorder %s15, 0
    %p56 = por %p54, %p55
    %s57 = ssub.s32 %s16, %s28
    %p58 = scmp.eq.s32.totalorder %s57, 0
    %s60 = sadd.s32 %s59, 1
    %s61 = scalar_select %p58, %s59, %s60
    %p64 = pneg %p58
    %p65 = scmp.eq.s32.totalorder %s9, 1
    %p66 = por %p64, %p65
    %p67 = scmp.ne.s32.totalorder %s59, %s62
    %p68 = scmp.eq.s32.totalorder %s9, 0
    %p69 = por %p67, %p68
    %p70 = scmp.ne.s32.totalorder %s59, %s62
    %p71 = scmp.eq.s32.totalorder %s14, 1
    %p72 = por %p70, %p71
    %p73 = scmp.ne.s32.totalorder %s62, %s63
    %p74 = scmp.eq.s32.totalorder %s14, 0
    %p75 = por %p73, %p74
    %p76 = scmp.ne.s32.totalorder %s62, %s63
    %p77 = scmp.eq.s32.totalorder %s15, 1
    %p78 = por %p76, %p77
    %p80 = scmp.ne.s32.totalorder %s63, %s79
    %p81 = scmp.eq.s32.totalorder %s15, 0
    %p82 = por %p80, %p81
    %s83 = ssub.s32 %s16, %s28
    %p84 = scmp.eq.s32.totalorder %s83, 0
    %s86 = sadd.s32 %s85, 1
    %s87 = scalar_select %p84, %s85, %s86
    %p90 = pneg %p84
    %p91 = scmp.eq.s32.totalorder %s9, 1
    %p92 = por %p90, %p91
    %p93 = scmp.ne.s32.totalorder %s85, %s88
    %p94 = scmp.eq.s32.totalorder %s9, 0
    %p95 = por %p93, %p94
    %p96 = scmp.ne.s32.totalorder %s85, %s88
    %p97 = scmp.eq.s32.totalorder %s14, 1
    %p98 = por %p96, %p97
    %p99 = scmp.ne.s32.totalorder %s88, %s89
    %p100 = scmp.eq.s32.totalorder %s14, 0
    %p101 = por %p99, %p100
    %p102 = scmp.ne.s32.totalorder %s88, %s89
    %p103 = scmp.eq.s32.totalorder %s15, 1
    %p104 = por %p102, %p103
    %p106 = scmp.ne.s32.totalorder %s89, %s105
    %p107 = scmp.eq.s32.totalorder %s15, 0
    %p108 = por %p106, %p107
    %s109 = ssub.s32 %s16, %s28
    %s110 = ssub.s32 %s17, %s24
    %s111 = sor.u32 %s109, %s110
    %p112 = scmp.eq.s32.totalorder %s111, 0
    %s114 = sadd.s32 %s113, 1
    %s115 = scalar_select %p112, %s113, %s114
    %p118 = pneg %p112
    %p119 = scmp.eq.s32.totalorder %s9, 1
    %p120 = por %p118, %p119
    %p121 = scmp.ne.s32.totalorder %s113, %s116
    %p122 = scmp.eq.s32.totalorder %s9, 0
    %p123 = por %p121, %p122
    %p124 = scmp.ne.s32.totalorder %s113, %s116
    %p125 = scmp.eq.s32.totalorder %s14, 1
    %p126 = por %p124, %p125
    %p127 = scmp.ne.s32.totalorder %s116, %s117
    %p128 = scmp.eq.s32.totalorder %s14, 0
    %p129 = por %p127, %p128
    %p130 = scmp.ne.s32.totalorder %s116, %s117
    %p131 = scmp.eq.s32.totalorder %s15, 1
    %p132 = por %p130, %p131
    %p134 = scmp.ne.s32.totalorder %s117, %s133
    %p135 = scmp.eq.s32.totalorder %s15, 0
    %p136 = por %p134, %p135
    %p137 = scmp.le.s32.totalorder 1, %s9
    %p138 = scmp.lt.s32.totalorder %s9, 3
    %p139 = pnand %p137, %p138
    %p140 = pneg %p139
    // Predicated region
    $region9: #{unet_downsample.3} parent=5 // pred_check
      _
    $region10: #{unet_downsample.3} parent=5 // pred_check_branch
      %142 = sbr.rel (%p139) target = $region12
    $region11: #{unet_downsample.3} parent=5 // pred_region
      %s143 = ssub.s32 %s9, 1
    $region12: #{unet_downsample.3} parent=5 // pred_fallthru
      _
    %p144 = scmp.lt.s32.totalorder %s9, 2
    // Predicated region
    $region13: #{unet_downsample.3} parent=5 // pred_check
      %p145 = pneg %p144
    $region14: #{unet_downsample.3} parent=5 // pred_check_branch
      %147 = sbr.rel (%p145) target = $region16
    $region15: #{unet_downsample.3} parent=5 // pred_region
      // Predicated region
      $region17: #{unet_downsample.3} parent=15 // pred_check
        %p148 = pneg %p43
      $region18: #{unet_downsample.3} parent=15 // pred_check_branch
        %150 = sbr.rel (%p148) target = $region20
      $region19: #{unet_downsample.3} parent=15 // pred_region
        %p151 = scmp.lt.s32.totalorder %s16, 1
        %s152 = scalar_select %p151, %s16, 1
        %p153 = scmp.lt.s32.totalorder %s17, 0
        %s154 = scalar_select %p153, %s17, 0
        %s155 = smul.addr %s152, 2
        %s156 = sadd.s32 %s154, %s155
        %s157 = smul.addr %s156, 8
        %s158 = scalar_lea.vmem %s0, %s157
      $region20: #{unet_downsample.3} parent=15 // pred_fallthru
        _
      // Predicated region
      $region21: #{unet_downsample.3} parent=15 // pred_check
        %p159 = pneg %p69
      $region22: #{unet_downsample.3} parent=15 // pred_check_branch
        %161 = sbr.rel (%p159) target = $region24
      $region23: #{unet_downsample.3} parent=15 // pred_region
        %p162 = scmp.lt.s32.totalorder %s16, 1
        %s163 = scalar_select %p162, %s16, 1
        %s164 = smul.addr %s163, 2
        %s165 = smul.addr %s164, 8
        %s166 = scalar_lea.vmem %s1, %s165
      $region24: #{unet_downsample.3} parent=15 // pred_fallthru
        _
      // Predicated region
      $region25: #{unet_downsample.3} parent=15 // pred_check
        %p167 = pneg %p95
      $region26: #{unet_downsample.3} parent=15 // pred_check_branch
        %169 = sbr.rel (%p167) target = $region28
      $region27: #{unet_downsample.3} parent=15 // pred_region
        %p170 = scmp.lt.s32.totalorder %s16, 1
        %s171 = scalar_select %p170, %s16, 1
        %s172 = smul.addr %s171, 2
        %s173 = smul.addr %s172, 8
        %s174 = scalar_lea.vmem %s2, %s173
      $region28: #{unet_downsample.3} parent=15 // pred_fallthru
        _
    $region16: #{unet_downsample.3} parent=5 // pred_fallthru
      _
    %p175 = scmp.le.s32.totalorder 1, %s9
    %p176 = scmp.lt.s32.totalorder %s9, 3
    %p177 = pnand %p175, %p176
    %p178 = pneg %p177
    // Predicated region
    $region29: #{unet_downsample.3} parent=5 // pred_check
      _
    $region30: #{unet_downsample.3} parent=5 // pred_check_branch
      %180 = sbr.rel (%p177) target = $region32
    $region31: #{unet_downsample.3} parent=5 // pred_region
      %s181 = ssub.s32 %s9, 1
      %p182 = scmp.lt.s32.totalorder %s18, 1
      %s183 = scalar_select %p182, %s18, 1
      %p184 = scmp.lt.s32.totalorder %s19, 0
      %s185 = scalar_select %p184, %s19, 0
      %s186 = smul.addr %s183, 2
      %s187 = sadd.s32 %s185, %s186
      %s188 = smul.addr %s187, 8
      %s189 = scalar_lea.vmem %s0, %s188
      %p190 = pneg %p49
      %p191 = pneg %p46
      %p192 = scmp.lt.s32.totalorder %s18, 1
      %s193 = scalar_select %p192, %s18, 1
      %s194 = smul.addr %s193, 2
      %s195 = smul.addr %s194, 8
      %s196 = scalar_lea.vmem %s1, %s195
      %p197 = pneg %p75
      %p198 = pneg %p72
      %p199 = scmp.lt.s32.totalorder %s18, 1
      %s200 = scalar_select %p199, %s18, 1
      %s201 = smul.addr %s200, 2
      %s202 = smul.addr %s201, 8
      %s203 = scalar_lea.vmem %s2, %s202
      %p204 = pneg %p101
      %p205 = pneg %p98
      %p206 = pneg %p129
      %p207 = pneg %p126
      %p208 = scmp.lt.s32.totalorder %s18, 1
      %s209 = scalar_select %p208, %s18, 1
      %p210 = scmp.lt.s32.totalorder %s19, 0
      %s211 = scalar_select %p210, %s19, 0
      %s212 = smul.addr %s209, 2
      %s213 = sadd.s32 %s211, %s212
      %s214 = smul.addr %s213, 8
      %s215 = scalar_lea.vmem %s3, %s214
      %p216 = scmp.lt.s32.totalorder %s18, 1
      %s217 = scalar_select %p216, %s18, 1
      %p218 = scmp.lt.s32.totalorder %s19, 0
      %s219 = scalar_select %p218, %s19, 0
      %s220 = smul.addr %s217, 2
      %s221 = sadd.s32 %s219, %s220
      %s222 = smul.addr %s221, 8
      %s223 = scalar_lea.vmem %s0, %s222
      %p224 = scmp.lt.s32.totalorder %s18, 1
      %s225 = scalar_select %p224, %s18, 1
      %s226 = smul.addr %s225, 2
      %s227 = smul.addr %s226, 8
      %s228 = scalar_lea.vmem %s1, %s227
      %p229 = scmp.lt.s32.totalorder %s18, 1
      %s230 = scalar_select %p229, %s18, 1
      %s231 = smul.addr %s230, 2
      %s232 = smul.addr %s231, 8
      %s233 = scalar_lea.vmem %s2, %s232
      %p234 = scmp.lt.s32.totalorder %s18, 1
      %s235 = scalar_select %p234, %s18, 1
      %p236 = scmp.lt.s32.totalorder %s19, 0
      %s237 = scalar_select %p236, %s19, 0
      %s238 = smul.addr %s235, 2
      %s239 = sadd.s32 %s237, %s238
      %s240 = smul.addr %s239, 8
      %s241 = scalar_lea.vmem %s3, %s240
      %v242 = vld [vmem:[%s223] sm:$0xff]
      %v243 = vld [vmem:[%s223 + $0x8] sm:$0xff]
      %v244 = vld [vmem:[%s228] sm:$0xff]
      %v245 = vld [vmem:[%s228 + $0x8] sm:$0xff]
      %v246 = vmul.f32 %v244, 0.015625
      %v247 = vmul.f32 %v245, 0.015625
      %v248 = vld [vmem:[%s233] sm:$0xff]
      %v249 = vld [vmem:[%s233 + $0x8] sm:$0xff]
      %v250 = vmul.f32 %v248, 0.015625
      %v251 = vmul.f32 %v249, 0.015625
      %v252 = vmul.f32 %v246, %v246
      %v253 = vmul.f32 %v247, %v247
      %v254 = vsub.f32 %v250, %v252
      %v255 = vsub.f32 %v251, %v253
      %v256 = vmax.f32 %v254, 0.0
      %v257 = vmax.f32 %v255, 0.0
      %v258 = vadd.f32 %v256, 1e-05
      %v259 = vadd.f32 %v257, 1e-05
      %v260 = vrsqrt.pop %v258
      %v261 = vrsqrt.pop %v259
      %263 = vset.pattern.permute.xlu0 0
      %264 = vperm.xlu0 %263, %v246
      %v265 = vpop.permute.xlu0 %264
      %268 = vset.pattern.permute.xlu0 0
      %269 = vperm.xlu0 %268, %v247
      %v270 = vpop.permute.xlu0 %269
      %v272 = vsub.f32 %v242, %v265
      %v273 = vsub.f32 %v243, %v270
      %275 = vset.pattern.permute.xlu0 0
      %276 = vperm.xlu0 %275, %v260
      %v277 = vpop.permute.xlu0 %276
      %280 = vset.pattern.permute.xlu0 0
      %281 = vperm.xlu0 %280, %v261
      %v282 = vpop.permute.xlu0 %281
      %v284 = vmul.f32 %v272, %v277
      %v285 = vmul.f32 %v273, %v282
      %vm286 = vcmp.gt.f32.partialorder %v284, 0.0
      %vm287 = vcmp.gt.f32.partialorder %v285, 0.0
      %v288 = vmul.f32 %v284, 0.2
      %v289 = vmul.f32 %v285, 0.2
      %v290 = vsel %vm286, %v284, %v288
      %v291 = vsel %vm287, %v285, %v289
      %292 = vst [vmem:[%s241] sm:$0xff] %v290
      %293 = vst [vmem:[%s241 + $0x8] sm:$0xff] %v291
      %p294 = scmp.lt.s32.totalorder %s18, 1
      %s295 = scalar_select %p294, %s18, 1
      %p296 = scmp.lt.s32.totalorder %s19, 0
      %s297 = scalar_select %p296, %s19, 0
      %s298 = smul.addr %s295, 2
      %s299 = sadd.s32 %s297, %s298
      %s300 = smul.addr %s299, 8
      %s301 = scalar_lea.vmem %s3, %s300
      // Predicated region
      $region33: #{unet_downsample.3} parent=31 // pred_check
        %p302 = pneg %p126
      $region34: #{unet_downsample.3} parent=31 // pred_check_branch
        %304 = sbr.rel (%p302) target = $region36
      $region35: #{unet_downsample.3} parent=31 // pred_region
        _
      $region36: #{unet_downsample.3} parent=31 // pred_fallthru
        _
    $region32: #{unet_downsample.3} parent=5 // pred_fallthru
      _
    %p305 = scmp.le.s32.totalorder 2, %s9
    // Predicated region
    $region37: #{unet_downsample.3} parent=5 // pred_check
      %p306 = pneg %p305
    $region38: #{unet_downsample.3} parent=5 // pred_check_branch
      %308 = sbr.rel (%p306) target = $region40
    $region39: #{unet_downsample.3} parent=5 // pred_region
      %s309 = ssub.s32 %s9, 2
      // Predicated region
      $region41: #{unet_downsample.3} parent=39 // pred_check
        %p310 = pneg %p132
      $region42: #{unet_downsample.3} parent=39 // pred_check_branch
        %312 = sbr.rel (%p310) target = $region44
      $region43: #{unet_downsample.3} parent=39 // pred_region
        %p313 = scmp.lt.s32.totalorder %s20, 1
        %s314 = scalar_select %p313, %s20, 1
        %p315 = scmp.lt.s32.totalorder %s21, 0
        %s316 = scalar_select %p315, %s21, 0
        %s317 = smul.addr %s314, 2
        %s318 = sadd.s32 %s316, %s317
        %s319 = smul.addr %s318, 8
        %s320 = scalar_lea.vmem %s3, %s319
      $region44: #{unet_downsample.3} parent=39 // pred_fallthru
        _
    $region40: #{unet_downsample.3} parent=5 // pred_fallthru
      _
  $region6: #{unet_downsample.3} parent=0 // loop_footer
    %s13 = sadd.s32 1, %s9
  $region7: #{unet_downsample.3} parent=0 // loop_footer_branch
    %8 = sbr.rel target = $region3
  $region8: #{unet_downsample.3} parent=0 // loop_exit
    _

// kernel: unet_downsample.2
$region0: #{unet_downsample.2}
  #allocation0 [shape = 'u32[]', space=smem, size = 0x4, offset = 0x4, fixed_abs, tag = 'smem constant byte address 0x4 - core index']
  #allocation1 [shape = 'u32[144,128]{1,0:T(1,128)}', space=vmem, size = 0x12000, scoped, tag = 'internal scratch']
  %s0 = inlined_call_operand.vmem [shape: bf16[2,128,128], index: 0, kind: input, shape index: {}]
  %s1 = inlined_call_operand.vmem [shape: bf16[16,128], index: 1, kind: input, shape index: {}]
  %s2 = inlined_call_operand.vmem [shape: f32[2,16,128], index: 2, kind: output, shape index: {0}]
  %s3 = inlined_call_operand.vmem [shape: f32[2,16,1], index: 3, kind: output, shape index: {1}]
  %s4 = inlined_call_operand.vmem [shape: f32[2,16,1], index: 4, kind: output, shape index: {2}]
  %5 = xla_tuple %s2, %s3, %s4
  %s6 = sld [smem:[#allocation0]]
  $region61: #{unet_downsample.2} parent=0
    _
  %s8 = ssub.s32 1, %s6
  %s9 = scalar_select 0, %s8, %s6
  loop: start=0, step=1, limit=4
  $region2: #{unet_downsample.2} parent=0 // loop_pre_header
    _
  $region3: #{unet_downsample.2} parent=0 // loop_header
    %s11 = sphi 0, %s15
    %p12 = scmp.ge.s32.totalorder %s11, 4
    %s18 = sphi 0, %s30
    %s19 = sphi 0, %s26
    %s20 = sphi 0, %s18
    %s21 = sphi 0, %s19
    %s22 = sphi 0, %s20
    %s23 = sphi 0, %s21
    %s35 = sphi 0, %s37
    %s38 = sphi 0, %s35
    %s39 = sphi 0, %s38
    %s55 = sphi 0, %s39
    %s59 = sphi 0, %s59
    %s61 = sphi 0, %s59
    %s62 = sphi 0, %s61
    %s76 = sphi 0, %s62
    %s84 = sphi 0, %s86
    %s87 = sphi 0, %s84
    %s88 = sphi 0, %s87
    %s104 = sphi 0, %s88
    %s110 = sphi 0, %s112
    %s113 = sphi 0, %s110
    %s114 = sphi 0, %s113
    %s130 = sphi 0, %s114
    %s136 = sphi 0, %s138
    %s139 = sphi 0, %s136
    %s140 = sphi 0, %s139
    %s156 = sphi 0, %s140
  $region4: #{unet_downsample.2} parent=0 // loop_header_branch
    %14 = sbr.rel (%p12) target = $region8
  $region5: #{unet_downsample.2} parent=0 // loop_body
    %s16 = ssub.s32 %s11, 1
    %s17 = ssub.s32 %s11, 2
    %s24 = sadd.s32 1, %s19
    %p25 = scmp.ge.s32.totalorder %s24, 1
    %s26 = scalar_select %p25, 0, %s24
    %s27 = sadd.s32 1, %s18
    %s28 = scalar_select %p25, %s27, %s18
    %p29 = scmp.ge.s32.totalorder %s28, 2
    %s30 = scalar_select %p29, 0, %s28
    %s31 = ssub.s32 %s18, %s30
    %s32 = ssub.s32 %s19, %s26
    %s33 = sor.u32 %s31, %s32
    %p34 = scmp.eq.s32.totalorder %s33, 0
    %s36 = sadd.s32 %s35, 1
    %s37 = scalar_select %p34, %s35, %s36
    %p40 = pneg %p34
    %p41 = scmp.eq.s32.totalorder %s11, 1
    %p42 = por %p40, %p41
    %p43 = scmp.ne.s32.totalorder %s35, %s38
    %p44 = scmp.eq.s32.totalorder %s11, 0
    %p45 = por %p43, %p44
    %p46 = scmp.ne.s32.totalorder %s35, %s38
    %p47 = scmp.eq.s32.totalorder %s16, 1
    %p48 = por %p46, %p47
    %p49 = scmp.ne.s32.totalorder %s38, %s39
    %p50 = scmp.eq.s32.totalorder %s16, 0
    %p51 = por %p49, %p50
    %p52 = scmp.ne.s32.totalorder %s38, %s39
    %p53 = scmp.eq.s32.totalorder %s17, 1
    %p54 = por %p52, %p53
    %p56 = scmp.ne.s32.totalorder %s39, %s55
    %p57 = scmp.eq.s32.totalorder %s17, 0
    %p58 = por %p56, %p57
    %s60 = sadd.s32 %s59, 1
    %p63 = scmp.eq.s32.totalorder %s11, 1
    %p64 = scmp.ne.s32.totalorder %s59, %s61
    %p65 = scmp.eq.s32.totalorder %s11, 0
    %p66 = por %p64, %p65
    %p67 = scmp.ne.s32.totalorder %s59, %s61
    %p68 = scmp.eq.s32.totalorder %s16, 1
    %p69 = por %p67, %p68
    %p70 = scmp.ne.s32.totalorder %s61, %s62
    %p71 = scmp.eq.s32.totalorder %s16, 0
    %p72 = por %p70, %p71
    %p73 = scmp.ne.s32.totalorder %s61, %s62
    %p74 = scmp.eq.s32.totalorder %s17, 1
    %p75 = por %p73, %p74
    %p77 = scmp.ne.s32.totalorder %s62, %s76
    %p78 = scmp.eq.s32.totalorder %s17, 0
    %p79 = por %p77, %p78
    %s80 = ssub.s32 %s18, %s30
    %s81 = ssub.s32 %s19, %s26
    %s82 = sor.u32 %s80, %s81
    %p83 = scmp.eq.s32.totalorder %s82, 0
    %s85 = sadd.s32 %s84, 1
    %s86 = scalar_select %p83, %s84, %s85
    %p89 = pneg %p83
    %p90 = scmp.eq.s32.totalorder %s11, 1
    %p91 = por %p89, %p90
    %p92 = scmp.ne.s32.totalorder %s84, %s87
    %p93 = scmp.eq.s32.totalorder %s11, 0
    %p94 = por %p92, %p93
    %p95 = scmp.ne.s32.totalorder %s84, %s87
    %p96 = scmp.eq.s32.totalorder %s16, 1
    %p97 = por %p95, %p96
    %p98 = scmp.ne.s32.totalorder %s87, %s88
    %p99 = scmp.eq.s32.totalorder %s16, 0
    %p100 = por %p98, %p99
    %p101 = scmp.ne.s32.totalorder %s87, %s88
    %p102 = scmp.eq.s32.totalorder %s17, 1
    %p103 = por %p101, %p102
    %p105 = scmp.ne.s32.totalorder %s88, %s104
    %p106 = scmp.eq.s32.totalorder %s17, 0
    %p107 = por %p105, %p106
    %s108 = ssub.s32 %s18, %s30
    %p109 = scmp.eq.s32.totalorder %s108, 0
    %s111 = sadd.s32 %s110, 1
    %s112 = scalar_select %p109, %s110, %s111
    %p115 = pneg %p109
    %p116 = scmp.eq.s32.totalorder %s11, 1
    %p117 = por %p115, %p116
    %p118 = scmp.ne.s32.totalorder %s110, %s113
    %p119 = scmp.eq.s32.totalorder %s11, 0
    %p120 = por %p118, %p119
    %p121 = scmp.ne.s32.totalorder %s110, %s113
    %p122 = scmp.eq.s32.totalorder %s16, 1
    %p123 = por %p121, %p122
    %p124 = scmp.ne.s32.totalorder %s113, %s114
    %p125 = scmp.eq.s32.totalorder %s16, 0
    %p126 = por %p124, %p125
    %p127 = scmp.ne.s32.totalorder %s113, %s114
    %p128 = scmp.eq.s32.totalorder %s17, 1
    %p129 = por %p127, %p128
    %p131 = scmp.ne.s32.totalorder %s114, %s130
    %p132 = scmp.eq.s32.totalorder %s17, 0
    %p133 = por %p131, %p132
    %s134 = ssub.s32 %s18, %s30
    %p135 = scmp.eq.s32.totalorder %s134, 0
    %s137 = sadd.s32 %s136, 1
    %s138 = scalar_select %p135, %s136, %s137
    %p141 = pneg %p135
    %p142 = scmp.eq.s32.totalorder %s11, 1
    %p143 = por %p141, %p142
    %p144 = scmp.ne.s32.totalorder %s136, %s139
    %p145 = scmp.eq.s32.totalorder %s11, 0
    %p146 = por %p144, %p145
    %p147 = scmp.ne.s32.totalorder %s136, %s139
    %p148 = scmp.eq.s32.totalorder %s16, 1
    %p149 = por %p147, %p148
    %p150 = scmp.ne.s32.totalorder %s139, %s140
    %p151 = scmp.eq.s32.totalorder %s16, 0
    %p152 = por %p150, %p151
    %p153 = scmp.ne.s32.totalorder %s139, %s140
    %p154 = scmp.eq.s32.totalorder %s17, 1
    %p155 = por %p153, %p154
    %p157 = scmp.ne.s32.totalorder %s140, %s156
    %p158 = scmp.eq.s32.totalorder %s17, 0
    %p159 = por %p157, %p158
    %p160 = scmp.le.s32.totalorder 1, %s11
    %p161 = scmp.lt.s32.totalorder %s11, 3
    %p162 = pnand %p160, %p161
    %p163 = pneg %p162
    // Predicated region
    $region9: #{unet_downsample.2} parent=5 // pred_check
      _
    $region10: #{unet_downsample.2} parent=5 // pred_check_branch
      %165 = sbr.rel (%p162) target = $region12
    $region11: #{unet_downsample.2} parent=5 // pred_region
      %s166 = ssub.s32 %s11, 1
      // Predicated region
      $region13: #{unet_downsample.2} parent=11 // pred_check
        %p167 = pneg %p72
      $region14: #{unet_downsample.2} parent=11 // pred_check_branch
        %169 = sbr.rel (%p167) target = $region16
      $region15: #{unet_downsample.2} parent=11 // pred_region
        _
      $region16: #{unet_downsample.2} parent=11 // pred_fallthru
        _
    $region12: #{unet_downsample.2} parent=5 // pred_fallthru
      _
    %p170 = scmp.lt.s32.totalorder %s11, 2
    // Predicated region
    $region17: #{unet_downsample.2} parent=5 // pred_check
      %p171 = pneg %p170
    $region18: #{unet_downsample.2} parent=5 // pred_check_branch
      %173 = sbr.rel (%p171) target = $region20
    $region19: #{unet_downsample.2} parent=5 // pred_region
      // Predicated region
      $region21: #{unet_downsample.2} parent=19 // pred_check
        %p174 = pneg %p45
      $region22: #{unet_downsample.2} parent=19 // pred_check_branch
        %176 = sbr.rel (%p174) target = $region24
      $region23: #{unet_downsample.2} parent=19 // pred_region
        %p177 = scmp.lt.s32.totalorder %s18, 1
        %s178 = scalar_select %p177, %s18, 1
        %p179 = scmp.lt.s32.totalorder %s19, 0
        %s180 = scalar_select %p179, %s19, 0
        %s181 = smul.addr %s178, 16
        %s182 = sadd.s32 %s180, %s181
        %s183 = smul.addr %s182, 4
        %s184 = scalar_lea.vmem %s0, %s183
      $region24: #{unet_downsample.2} parent=19 // pred_fallthru
        _
    $region20: #{unet_downsample.2} parent=5 // pred_fallthru
      _
    %p185 = scmp.le.s32.totalorder 1, %s11
    %p186 = scmp.lt.s32.totalorder %s11, 3
    %p187 = pnand %p185, %p186
    %p188 = pneg %p187
    // Predicated region
    $region25: #{unet_downsample.2} parent=5 // pred_check
      _
    $region26: #{unet_downsample.2} parent=5 // pred_check_branch
      %190 = sbr.rel (%p187) target = $region28
    $region27: #{unet_downsample.2} parent=5 // pred_region
      %s191 = ssub.s32 %s11, 1
      %p192 = scmp.lt.s32.totalorder %s20, 1
      %s193 = scalar_select %p192, %s20, 1
      %p194 = scmp.lt.s32.totalorder %s21, 0
      %s195 = scalar_select %p194, %s21, 0
      %s196 = smul.addr %s193, 16
      %s197 = sadd.s32 %s195, %s196
      %s198 = smul.addr %s197, 4
      %s199 = scalar_lea.vmem %s0, %s198
      %p200 = pneg %p51
      %p201 = pneg %p48
      %p202 = pneg %p72
      %p203 = pneg %p69
      %p204 = pneg %p100
      %p205 = pneg %p97
      %p206 = scmp.lt.s32.totalorder %s20, 1
      %s207 = scalar_select %p206, %s20, 1
      %p208 = scmp.lt.s32.totalorder %s21, 0
      %s209 = scalar_select %p208, %s21, 0
      %s210 = smul.addr %s207, 2
      %s211 = sadd.s32 %s209, %s210
      %s212 = smul.addr %s211, 8
      %s213 = scalar_lea.vmem %s2, %s212
      %p214 = pneg %p126
      %p215 = pneg %p123
      %p216 = scmp.lt.s32.totalorder %s20, 1
      %s217 = scalar_select %p216, %s20, 1
      %s218 = smul.addr %s217, 2
      %s219 = smul.addr %s218, 8
      %s220 = scalar_lea.vmem %s3, %s219
      %p221 = pneg %p152
      %p222 = pneg %p149
      %p223 = scmp.lt.s32.totalorder %s20, 1
      %s224 = scalar_select %p223, %s20, 1
      %s225 = smul.addr %s224, 2
      %s226 = smul.addr %s225, 8
      %s227 = scalar_lea.vmem %s4, %s226
      %p228 = scmp.lt.s32.totalorder %s20, 1
      %s229 = scalar_select %p228, %s20, 1
      %p230 = scmp.lt.s32.totalorder %s21, 0
      %s231 = scalar_select %p230, %s21, 0
      %s232 = smul.addr %s229, 16
      %s233 = sadd.s32 %s231, %s232
      %s234 = smul.addr %s233, 4
      %s235 = scalar_lea.vmem %s0, %s234
      %p236 = scmp.lt.s32.totalorder %s20, 1
      %s237 = scalar_select %p236, %s20, 1
      %p238 = scmp.lt.s32.totalorder %s21, 0
      %s239 = scalar_select %p238, %s21, 0
      %s240 = smul.addr %s237, 2
      %s241 = sadd.s32 %s239, %s240
      %s242 = smul.addr %s241, 8
      %s243 = scalar_lea.vmem %s2, %s242
      %p244 = scmp.lt.s32.totalorder %s20, 1
      %s245 = scalar_select %p244, %s20, 1
      %s246 = smul.addr %s245, 2
      %s247 = smul.addr %s246, 8
      %s248 = scalar_lea.vmem %s3, %s247
      %p249 = scmp.lt.s32.totalorder %s20, 1
      %s250 = scalar_select %p249, %s20, 1
      %s251 = smul.addr %s250, 2
      %s252 = smul.addr %s251, 8
      %s253 = scalar_lea.vmem %s4, %s252
      %v255 = vld [vmem:[%s1] sm:$0xf]
      %v256 = vld [vmem:[%s1 + $0x4] sm:$0xf]
      %v257 = vld [vmem:[%s235] sm:$0xf]
      %v258 = vld [vmem:[%s235 + $0x4] sm:$0xf]
      %v259 = vld [vmem:[%s235 + $0x8] sm:$0xf]
      %v260 = vld [vmem:[%s235 + $0xc] sm:$0xf]
      %v261 = vld [vmem:[%s235 + $0x10] sm:$0xf]
      %v262 = vld [vmem:[%s235 + $0x14] sm:$0xf]
      %v263 = vld [vmem:[%s235 + $0x18] sm:$0xf]
      %v264 = vld [vmem:[%s235 + $0x1c] sm:$0xf]
      %v265 = vld [vmem:[%s235 + $0x20] sm:$0xf]
      %v266 = vld [vmem:[%s235 + $0x24] sm:$0xf]
      %v267 = vld [vmem:[%s235 + $0x28] sm:$0xf]
      %v268 = vld [vmem:[%s235 + $0x2c] sm:$0xf]
      %v269 = vld [vmem:[%s235 + $0x30] sm:$0xf]
      %v270 = vld [vmem:[%s235 + $0x34] sm:$0xf]
      %v271 = vld [vmem:[%s235 + $0x38] sm:$0xf]
      %v272 = vld [vmem:[%s235 + $0x3c] sm:$0xf]
      %v275 = vunpack.c.l.b16 %v255
      %v276 = vunpack.c.l.b16 %v256
      %v277 = vpack.c.b16 %v276, %v275
      %v295 = vunpack.c.l.b16 %v257
      %v296 = vunpack.c.l.b16 %v258
      %v297 = vunpack.c.l.b16 %v259
      %v298 = vunpack.c.l.b16 %v260
      %v299 = vunpack.c.l.b16 %v261
      %v300 = vunpack.c.l.b16 %v262
      %v301 = vunpack.c.l.b16 %v263
      %v302 = vunpack.c.l.b16 %v264
      %v303 = vunpack.c.l.b16 %v265
      %v304 = vunpack.c.l.b16 %v266
      %v305 = vunpack.c.l.b16 %v267
      %v306 = vunpack.c.l.b16 %v268
      %v307 = vunpack.c.l.b16 %v269
      %v308 = vunpack.c.l.b16 %v270
      %v309 = vunpack.c.l.b16 %v271
      %v310 = vunpack.c.l.b16 %v272
      %v311 = vpack.c.b16 %v296, %v295
      %v312 = vpack.c.b16 %v298, %v297
      %v313 = vpack.c.b16 %v300, %v299
      %v314 = vpack.c.b16 %v302, %v301
      %v315 = vpack.c.b16 %v304, %v303
      %v316 = vpack.c.b16 %v306, %v305
      %v317 = vpack.c.b16 %v308, %v307
      %v318 = vpack.c.b16 %v310, %v309
      %327 = vmatprep.subr.bf16.mxu0 0
      %328 = vmatpush1.bf16.msra.mxu0 %v311
      %329 = vmatprep.subr.bf16.mxu0 0
      %330 = vmatpush1.bf16.msra.mxu0 %v312
      %331 = vmatprep.subr.bf16.mxu0 0
      %332 = vmatpush1.bf16.msra.mxu0 %v313
      %333 = vmatprep.subr.bf16.mxu0 0
      %334 = vmatpush1.bf16.msra.mxu0 %v314
      %335 = vmatprep.subr.bf16.mxu0 0
      %336 = vmatpush1.bf16.msra.mxu0 %v315
      %337 = vmatprep.subr.bf16.mxu0 0
      %338 = vmatpush1.bf16.msra.mxu0 %v316
      %339 = vmatprep.subr.bf16.mxu0 0
      %340 = vmatpush1.bf16.msra.mxu0 %v317
      %341 = vmatprep.subr.bf16.mxu0 0
      %342 = vmatpush1.bf16.msra.mxu0 %v318
      %343 = vmatprep.subr.bf16.mxu0 0
      %344 = vmatpush1.bf16.msra.mxu0 0
      %345 = vmatprep.subr.bf16.mxu0 0
      %346 = vmatpush1.bf16.msra.mxu0 0
      %347 = vmatprep.subr.bf16.mxu0 0
      %348 = vmatpush1.bf16.msra.mxu0 0
      %349 = vmatprep.subr.bf16.mxu0 0
      %350 = vmatpush1.bf16.msra.mxu0 0
      %351 = vmatprep.subr.bf16.mxu0 0
      %352 = vmatpush1.bf16.msra.mxu0 0
      %353 = vmatprep.subr.bf16.mxu0 0
      %354 = vmatpush1.bf16.msra.mxu0 0
      %355 = vmatprep.subr.bf16.mxu0 0
      %356 = vmatpush1.bf16.msra.mxu0 0
      %357 = vmatprep.subr.bf16.mxu0 0
      %358 = vmatpush1.bf16.msra.mxu0 0
      %359 = vmatprep.mubr.bf16.mxu0 0
      %360 = vmatmul.mubr.bf16.gmra.mrb[0].mxu0 %v277
      %v361 = vpop.f32.mrb[0].mxu0
      %v362 = vadd.f32 0.0, %v361
      %v363 = vpop.f32.mrb[0].mxu0
      %v364 = vpop.f32.mrb[0].mxu0
      %v365 = vadd.f32 0.0, %v364
      %v366 = vpop.f32.mrb[0].mxu0
      %367 = vdwg.mxu0
      %368 = vst [vmem:[%s243] sm:$0xff] %v362
      %369 = vst [vmem:[%s243 + $0x8] sm:$0xff] %v365
      %p370 = scmp.eq.s32.totalorder %s21, 0
      // Predicated region
      $region29: #{unet_downsample.2} parent=27 // pred_check
        %p371 = pneg %p370
      $region30: #{unet_downsample.2} parent=27 // pred_check_branch
        %373 = sbr.rel (%p371) target = $region32
      $region31: #{unet_downsample.2} parent=27 // pred_region
        %vm374 = vcmask 7168
        %375 = vst.msk [vmem:[%s248] sm:$0xff] %vm374, 0.0
        %376 = vst.msk [vmem:[%s248 + $0x8] sm:$0xff] %vm374, 0.0
        %377 = vst.msk [vmem:[%s253] sm:$0xff] %vm374, 0.0
        %378 = vst.msk [vmem:[%s253 + $0x8] sm:$0xff] %vm374, 0.0
      $region32: #{unet_downsample.2} parent=27 // pred_fallthru
        _
      %v379 = vld [vmem:[%s248] sm:$0xff]
      %v380 = vld [vmem:[%s248 + $0x8] sm:$0xff]
      %381 = vadd.xlane.f32.xlu0 %v362
      %v382 = vpop.xlane.xlu0 %381
      %383 = vadd.xlane.f32.xlu0 %v365
      %v384 = vpop.xlane.xlu0 %383
      %v385 = vadd.f32 %v379, %v382
      %v386 = vadd.f32 %v380, %v384
      %vm387 = vcmask 7168
      %388 = vst.msk [vmem:[%s248] sm:$0xff] %vm387, %v385
      %389 = vst.msk [vmem:[%s248 + $0x8] sm:$0xff] %vm387, %v386
      %v390 = vld [vmem:[%s253] sm:$0xff]
      %v391 = vld [vmem:[%s253 + $0x8] sm:$0xff]
      %v392 = vmul.f32 %v362, %v362
      %v393 = vmul.f32 %v365, %v365
      %394 = vadd.xlane.f32.xlu0 %v392
      %v395 = vpop.xlane.xlu0 %394
      %396 = vadd.xlane.f32.xlu0 %v393
      %v397 = vpop.xlane.xlu0 %396
      %v398 = vadd.f32 %v390, %v395
      %v399 = vadd.f32 %v391, %v397
      %400 = vst.msk [vmem:[%s253] sm:$0xff] %vm387, %v398
      %401 = vst.msk [vmem:[%s253 + $0x8] sm:$0xff] %vm387, %v399
      %p402 = scmp.lt.s32.totalorder %s20, 1
      %s403 = scalar_select %p402, %s20, 1
      %p404 = scmp.lt.s32.totalorder %s21, 0
      %s405 = scalar_select %p404, %s21, 0
      %s406 = smul.addr %s403, 2
      %s407 = sadd.s32 %s405, %s406
      %s408 = smul.addr %s407, 8
      %s409 = scalar_lea.vmem %s2, %s408
      %p410 = scmp.lt.s32.totalorder %s20, 1
      %s411 = scalar_select %p410, %s20, 1
      %s412 = smul.addr %s411, 2
      %s413 = smul.addr %s412, 8
      %s414 = scalar_lea.vmem %s3, %s413
      %p415 = scmp.lt.s32.totalorder %s20, 1
      %s416 = scalar_select %p415, %s20, 1
      %s417 = smul.addr %s416, 2
      %s418 = smul.addr %s417, 8
      %s419 = scalar_lea.vmem %s4, %s418
      // Predicated region
      $region33: #{unet_downsample.2} parent=27 // pred_check
        %p420 = pneg %p97
      $region34: #{unet_downsample.2} parent=27 // pred_check_branch
        %422 = sbr.rel (%p420) target = $region36
      $region35: #{unet_downsample.2} parent=27 // pred_region
        _
      $region36: #{unet_downsample.2} parent=27 // pred_fallthru
        _
      // Predicated region
      $region37: #{unet_downsample.2} parent=27 // pred_check
        %p423 = pneg %p123
      $region38: #{unet_downsample.2} parent=27 // pred_check_branch
        %425 = sbr.rel (%p423) target = $region40
      $region39: #{unet_downsample.2} parent=27 // pred_region
        _
      $region40: #{unet_downsample.2} parent=27 // pred_fallthru
        _
      // Predicated region
      $region41: #{unet_downsample.2} parent=27 // pred_check
        %p426 = pneg %p149
      $region42: #{unet_downsample.2} parent=27 // pred_check_branch
        %428 = sbr.rel (%p426) target = $region44
      $region43: #{unet_downsample.2} parent=27 // pred_region
        _
      $region44: #{unet_downsample.2} parent=27 // pred_fallthru
        _
    $region28: #{unet_downsample.2} parent=5 // pred_fallthru
      _
    %p429 = scmp.le.s32.totalorder 2, %s11
    // Predicated region
    $region45: #{unet_downsample.2} parent=5 // pred_check
      %p430 = pneg %p429
    $region46: #{unet_downsample.2} parent=5 // pred_check_branch
      %432 = sbr.rel (%p430) target = $region48
    $region47: #{unet_downsample.2} parent=5 // pred_region
      %s433 = ssub.s32 %s11, 2
      // Predicated region
      $region49: #{unet_downsample.2} parent=47 // pred_check
        %p434 = pneg %p103
      $region50: #{unet_downsample.2} parent=47 // pred_check_branch
        %436 = sbr.rel (%p434) target = $region52
      $region51: #{unet_downsample.2} parent=47 // pred_region
        %p437 = scmp.lt.s32.totalorder %s22, 1
        %s438 = scalar_select %p437, %s22, 1
        %p439 = scmp.lt.s32.totalorder %s23, 0
        %s440 = scalar_select %p439, %s23, 0
        %s441 = smul.addr %s438, 2
        %s442 = sadd.s32 %s440, %s441
        %s443 = smul.addr %s442, 8
        %s444 = scalar_lea.vmem %s2, %s443
      $region52: #{unet_downsample.2} parent=47 // pred_fallthru
        _
      // Predicated region
      $region53: #{unet_downsample.2} parent=47 // pred_check
        %p445 = pneg %p129
      $region54: #{unet_downsample.2} parent=47 // pred_check_branch
        %447 = sbr.rel (%p445) target = $region56
      $region55: #{unet_downsample.2} parent=47 // pred_region
        %p448 = scmp.lt.s32.totalorder %s22, 1
        %s449 = scalar_select %p448, %s22, 1
        %s450 = smul.addr %s449, 2
        %s451 = smul.addr %s450, 8
        %s452 = scalar_lea.vmem %s3, %s451
      $region56: #{unet_downsample.2} parent=47 // pred_fallthru
        _
      // Predicated region
      $region57: #{unet_downsample.2} parent=47 // pred_check
        %p453 = pneg %p155
      $region58: #{unet_downsample.2} parent=47 // pred_check_branch
        %455 = sbr.rel (%p453) target = $region60
      $region59: #{unet_downsample.2} parent=47 // pred_region
        %p456 = scmp.lt.s32.totalorder %s22, 1
        %s457 = scalar_select %p456, %s22, 1
        %s458 = smul.addr %s457, 2
        %s459 = smul.addr %s458, 8
        %s460 = scalar_lea.vmem %s4, %s459
      $region60: #{unet_downsample.2} parent=47 // pred_fallthru
        _
    $region48: #{unet_downsample.2} parent=5 // pred_fallthru
      _
  $region6: #{unet_downsample.2} parent=0 // loop_footer
    %s15 = sadd.s32 1, %s11
  $region7: #{unet_downsample.2} parent=0 // loop_footer_branch
    %10 = sbr.rel target = $region3
  $region8: #{unet_downsample.2} parent=0 // loop_exit
    _

</llo_original>
